<compile_context>
chip_gen: v7x
topology: tpu7x:2x2x1
jax: 0.10.0
libtpu: 0.0.40
codegen_flags: <defaults>
</compile_context>

<pallas_src>
import functools
import math

import jax
import jax.numpy as jnp
from jax.experimental import pallas as pl
from jax.experimental.pallas import tpu as pltpu

BN_EPS = 1e-5
LANE = 128


def _round_up(x, m):
    return (x + m - 1) // m * m


def _cdiv(a, b):
    return (a + b - 1) // b


def _elu(v):
    # F.elu with alpha=1.0 (f32 elementwise)
    return jnp.where(v > 0, v, jnp.exp(v) - 1.0)


# ---------------------------------------------------------------- vmem / tiles ---

@functools.lru_cache(maxsize=None)
def _vmem_limit_bytes():
    """Per-generation scoped-VMEM budget with headroom above physical capacity."""
    try:
        cap = int(getattr(pltpu.get_tpu_info(), "vmem_capacity_bytes", 0)) or (64 << 20)
    except Exception:  # pragma: no cover - conservative fallback (safe on v7x too)
        cap = 64 << 20
    # 75% of physical (v7x 64MiB -> 48MiB, v5e/v6e 128MiB -> 96MiB), capped.
    return max(32 << 20, min(cap * 3 // 4, 96 << 20))


def _compiler_params():
    return pltpu.CompilerParams(
        dimension_semantics=("parallel",),      # v7x: shard row tiles on both TCs
        vmem_limit_bytes=_vmem_limit_bytes())


def _auto_tile_m(M, n_in, hp, h2p, n_out, vmem_limit):
    """Largest row tile whose estimated footprint fits the VMEM budget."""
    budget = int(vmem_limit * 0.55)             # headroom for compiler scratch
    # resident weights (bf16, single-buffered) + small f32 vectors
    w_bytes = (2 * (n_in * hp + hp * hp + hp * h2p + h2p * hp + hp * n_out)
               + 4 * (6 * hp + h2p + n_out + 2 * n_in))
    per_row = max(
        2 * 4 * n_in + 2 * 2 * hp + 4 * (n_in + 2 * hp),                # stage 1
        2 * 2 * hp + 2 * 2 * hp + 4 * (2 * hp + h2p) + 2 * (hp + h2p),  # stage 2
        2 * 2 * hp + 2 * 4 * n_out + 4 * (2 * hp + n_out),              # head
    )
    tile = max(8, (budget - w_bytes) // per_row)
    tile = min(tile, 4096)
    rows = _round_up(M, 8)
    if tile >= rows:
        # Whole problem fits in one tile: keep >= 2 tiles for v7x's second core
        # when the split is worth the per-step overhead.
        tile = rows if M < 1024 else _round_up(_cdiv(M, 2), 8)
    return max(8, (tile // 8) * 8)


def _resident_spec(shape):
    """Constant-index, single-buffered BlockSpec for weights resident in VMEM."""
    zeros = (0,) * len(shape)
    return pl.BlockSpec(shape, lambda i: zeros, pipeline_mode=pl.Buffered(1))


# ------------------------------------------------------------------ kernels ---

def _block_compute(x, wa_ref, ba_ref, wb_ref, bb_ref):
    """elu(x Wa + ba) -> elu(. Wb + bb); bf16 into the MXU, f32 everywhere else."""
    h = _elu(jnp.dot(x.astype(jnp.bfloat16), wa_ref[...],
                     preferred_element_type=jnp.float32) + ba_ref[...])
    h = _elu(jnp.dot(h.astype(jnp.bfloat16), wb_ref[...],
                     preferred_element_type=jnp.float32) + bb_ref[...])
    return h


def _stats_block(h):
    """(1, 2, hp) partial-stats slab: row 0 = sum, row 1 = sum of squares."""
    s1 = jnp.sum(h, axis=0, keepdims=True)
    s2 = jnp.sum(h * h, axis=0, keepdims=True)
    return jnp.concatenate([s1, s2], axis=0)[None]


def _write_h_and_stats(h, h_ref, stats_ref, last_tile_rows):
    # Stats come from the f32 activations; storage is bf16.
    h_ref[...] = h.astype(h_ref.dtype)
    stats_ref[...] = _stats_block(h)
    if last_tile_rows is not None:
        # Only the last tile can contain padded rows; redo its stats masked.
        @pl.when(pl.program_id(0) == pl.num_programs(0) - 1)
        def _():
            rows = jax.lax.broadcasted_iota(jnp.int32, h.shape, 0)
            hm = jnp.where(rows < last_tile_rows, h, 0.0)
            stats_ref[...] = _stats_block(hm)


def _mlp_block1_kernel(x_ref, wa_ref, ba_ref, wb_ref, bb_ref, h_ref, stats_ref,
                       *, last_tile_rows):
    """Stage 1: no pre-norm (identity), straight into the two Linears + ELU."""
    h = _block_compute(x_ref[...].astype(jnp.float32), wa_ref, ba_ref, wb_ref, bb_ref)
    _write_h_and_stats(h, h_ref, stats_ref, last_tile_rows)


def _mlp_block2_kernel(x_ref, scale_ref, shift_ref, wa_ref, ba_ref, wb_ref, bb_ref,
                       h_ref, stats_ref, *, last_tile_rows):
    """BN of previous stage folded into (scale, shift), then the MLP block."""
    xn = x_ref[...].astype(jnp.float32) * scale_ref[...] + shift_ref[...]
    h = _block_compute(xn, wa_ref, ba_ref, wb_ref, bb_ref)
    _write_h_and_stats(h, h_ref, stats_ref, last_tile_rows)


def _head_kernel(h_ref, scale_ref, shift_ref, w_ref, b_ref, o_ref):
    """BN(h) -> fc_out (only the real output columns are written)."""
    hn = h_ref[...].astype(jnp.float32) * scale_ref[...] + shift_ref[...]
    o_ref[...] = (jnp.dot(hn.astype(jnp.bfloat16), w_ref[...],
                          preferred_element_type=jnp.float32)
                  + b_ref[...]).astype(o_ref.dtype)


# ------------------------------------------------------------ pallas wrappers ---

def _mlp_block_call(x, prenorm, wa, ba, wb, bb, *, tile_m, m_real):
    mp, k = x.shape
    mid = wa.shape[1]
    hp = wb.shape[1]
    grid = mp // tile_m
    last_tile_rows = None if mp == m_real else m_real - (grid - 1) * tile_m

    cost = pl.CostEstimate(
        flops=2 * mp * (k * mid + mid * hp),
        transcendentals=mp * (mid + hp),
        bytes_accessed=(x.dtype.itemsize * mp * k + 2 * mp * hp
                        + 2 * (k * mid + mid * hp) + 4 * (mid + hp)
                        + 4 * grid * 2 * hp),
    )

    in_specs = [pl.BlockSpec((tile_m, k), lambda i: (i, 0))]       # streamed rows
    args = [x]
    if prenorm is None:
        kernel = functools.partial(_mlp_block1_kernel, last_tile_rows=last_tile_rows)
    else:
        scale, shift = prenorm
        in_specs += [_resident_spec((1, k)), _resident_spec((1, k))]
        args += [scale, shift]
        kernel = functools.partial(_mlp_block2_kernel, last_tile_rows=last_tile_rows)
    in_specs += [_resident_spec(wa.shape), _resident_spec(ba.shape),
                 _resident_spec(wb.shape), _resident_spec(bb.shape)]
    args += [wa, ba, wb, bb]

    h, stats = pl.pallas_call(
        kernel,
        out_shape=(jax.ShapeDtypeStruct((mp, hp), jnp.bfloat16),   # bf16 activations
                   jax.ShapeDtypeStruct((grid, 2, hp), jnp.float32)),
        grid=(grid,),
        in_specs=in_specs,
        out_specs=(pl.BlockSpec((tile_m, hp), lambda i: (i, 0)),
                   pl.BlockSpec((1, 2, hp), lambda i: (i, 0, 0))),
        compiler_params=_compiler_params(),
        cost_estimate=cost,
    )(*args)
    return h, stats


def _head_call(h, scale, shift, w, b, *, tile_m):
    mp, hp = h.shape
    n_out = w.shape[1]
    grid = mp // tile_m

    cost = pl.CostEstimate(
        flops=2 * mp * hp * n_out,
        transcendentals=0,
        bytes_accessed=2 * mp * hp + 4 * mp * n_out + 2 * hp * n_out + 4 * (2 * hp + n_out),
    )
    return pl.pallas_call(
        _head_kernel,
        out_shape=jax.ShapeDtypeStruct((mp, n_out), jnp.float32),
        grid=(grid,),
        in_specs=[pl.BlockSpec((tile_m, hp), lambda i: (i, 0)),
                  _resident_spec((1, hp)), _resident_spec((1, hp)),
                  _resident_spec((hp, n_out)), _resident_spec((1, n_out))],
        out_specs=pl.BlockSpec((tile_m, n_out), lambda i: (i, 0)),
        compiler_params=_compiler_params(),
        cost_estimate=cost,
    )(h, scale, shift, w, b)


def _finalize_stats(stats, m_real):
    """Combine per-tile (sum, sumsq) partials into fused BN (scale, shift)."""
    s1 = jnp.sum(stats[:, 0, :], axis=0)
    s2 = jnp.sum(stats[:, 1, :], axis=0)
    mean = s1 / m_real
    var = jnp.maximum(s2 / m_real - mean * mean, 0.0)
    scale = jax.lax.rsqrt(var + BN_EPS)
    shift = -mean * scale
    return scale[None, :], shift[None, :]            # each [1, hp]


# ------------------------------------------------------------------- params ---

def xavier_normal(key, fan_out, fan_in):
    std = math.sqrt(2.0 / (fan_in + fan_out))
    # PyTorch Linear weight is [out, in]; return it pre-transposed [in, out].
    return (jax.random.normal(key, (fan_out, fan_in), dtype=jnp.float32) * std).T


def init_params(key, n_in, n_hid):
    ks = jax.random.split(key, 5)
    bias = lambda n: jnp.full((1, n), 0.1, dtype=jnp.float32)
    return dict(
        # mlp1: Linear(n_in, n_hid), Linear(n_hid, n_hid)
        w1a=xavier_normal(ks[0], n_hid, n_in), b1a=bias(n_hid),
        w1b=xavier_normal(ks[1], n_hid, n_hid), b1b=bias(n_hid),
        # mlp2: Linear(n_hid, 2*n_hid), Linear(2*n_hid, n_hid)
        w2a=xavier_normal(ks[2], 2 * n_hid, n_hid), b2a=bias(2 * n_hid),
        w2b=xavier_normal(ks[3], n_hid, 2 * n_hid), b2b=bias(n_hid),
        # fc_out: Linear(n_hid, n_hid)
        wout=xavier_normal(ks[4], n_hid, n_hid), bout=bias(n_hid),
    )


def _pad2(a, rows, cols):
    return jnp.pad(a, ((0, rows - a.shape[0]), (0, cols - a.shape[1])))


def _prepare_kernel_params(params, n_in, n_hid):
    """Zero-pad hidden dims to lane-dense multiples of 128; weights to bf16.

    fc_out's weight is only row-padded so the head writes exactly n_hid cols.
    """
    hp = _round_up(n_hid, LANE)
    h2p = _round_up(2 * n_hid, LANE)
    bf = lambda a: a.astype(jnp.bfloat16)
    return dict(
        w1a=bf(_pad2(params["w1a"], n_in, hp)),  b1a=_pad2(params["b1a"], 1, hp),
        w1b=bf(_pad2(params["w1b"], hp, hp)),    b1b=_pad2(params["b1b"], 1, hp),
        w2a=bf(_pad2(params["w2a"], hp, h2p)),   b2a=_pad2(params["b2a"], 1, h2p),
        w2b=bf(_pad2(params["w2b"], h2p, hp)),   b2b=_pad2(params["b2b"], 1, hp),
        wout=bf(_pad2(params["wout"], hp, n_hid)),
        bout=params["bout"].astype(jnp.float32),
    )


# ------------------------------------------------------------------ forward ---

def mlp_encoder_single_time(x, params, *, tile_m=None):
    """x: [B, N, T, n_in] float32 -> node_embeddings [B, N, T, n_hid]."""
    B, N, T, n_in = x.shape
    n_hid = params["w1b"].shape[1]
    hp = _round_up(n_hid, LANE)
    h2p = _round_up(2 * n_hid, LANE)

    M = B * N * T
    if tile_m is None:
        tile_m = _auto_tile_m(M, n_in, hp, h2p, n_hid, _vmem_limit_bytes())
    tile_m = _round_up(max(8, min(tile_m, _round_up(M, 8))), 8)
    mp = _round_up(M, tile_m)

    xf = x.reshape(M, n_in).astype(jnp.float32)
    if mp > M:
        xf = jnp.pad(xf, ((0, mp - M), (0, 0)))

    p = _prepare_kernel_params(params, n_in, n_hid)

    # Stage 1: mlp1 pre-BN activations (bf16) + partial BN stats (no pre-norm).
    h1, st1 = _mlp_block_call(xf, None, p["w1a"], p["b1a"], p["w1b"], p["b1b"],
                              tile_m=tile_m, m_real=M)
    sc1, sh1 = _finalize_stats(st1, M)

    # Stage 2: BN(mlp1) -> mlp2 pre-BN activations (bf16) + partial BN stats.
    h2, st2 = _mlp_block_call(h1, (sc1, sh1), p["w2a"], p["b2a"], p["w2b"], p["b2b"],
                              tile_m=tile_m, m_real=M)
    sc2, sh2 = _finalize_stats(st2, M)

    # Stage 3: BN(mlp2) -> fc_out, writing only the real n_hid columns.
    out = _head_call(h2, sc2, sh2, p["wout"], p["bout"], tile_m=tile_m)
    if mp > M:
        out = out[:M]
    return out.reshape(B, N, T, n_hid)


# ---------------------------------------------------------------- reference ---

def _reference(x, params):
    """Pure-JAX reference mirroring the kernel arithmetic (bf16 matmuls,
    bf16 inter-stage storage, f32 elementwise, batch-stat BN)."""
    B, N, T, n_in = x.shape
    n_hid = params["wout"].shape[1]
    h = x.reshape(-1, n_in).astype(jnp.float32)

    def lin(h, w, b):
        return jnp.dot(h.astype(jnp.bfloat16), w.astype(jnp.bfloat16),
                       preferred_element_type=jnp.float32) + b

    def block(h, wa, ba, wb, bb):
        h = _elu(lin(h, wa, ba))
        h = _elu(lin(h, wb, bb))
        mean = jnp.mean(h, axis=0, keepdims=True)
        var = jnp.maximum(jnp.mean(h * h, axis=0, keepdims=True) - mean * mean, 0.0)
        scale = jax.lax.rsqrt(var + BN_EPS)
        shift = -mean * scale
        h_b = h.astype(jnp.bfloat16).astype(jnp.float32)   # bf16 inter-stage storage
        return h_b * scale + shift

    h = block(h, params["w1a"], params["b1a"], params["w1b"], params["b1b"])
    h = block(h, params["w2a"], params["b2a"], params["w2b"], params["b2b"])
    h = lin(h, params["wout"], params["bout"])
    return h.reshape(B, N, T, n_hid)


if __name__ == "__main__":
    key = jax.random.PRNGKey(0)
    k_x, k_p = jax.random.split(key)

    B, N, T = 2, 4, 16          # batch, nodes, timesteps -> M = 128 rows
    n_in, n_hid = 16, 32

    x = jax.random.normal(k_x, (B, N, T, n_in), dtype=jnp.float32)
    params = init_params(k_p, n_in, n_hid)
    ref = _reference(x, params)

    # Auto-derived tile (single tile at this tiny size).
    out = jax.block_until_ready(mlp_encoder_single_time(x, params))
    assert out.shape == (B, N, T, n_hid), out.shape
    assert jnp.allclose(out, ref, atol=1e-2, rtol=1e-2), float(jnp.max(jnp.abs(out - ref)))

    # Multi-tile grid + row-padding (last-tile stats masking) path.
    out2 = jax.block_until_ready(mlp_encoder_single_time(x, params, tile_m=48))
    assert jnp.allclose(out2, ref, atol=1e-2, rtol=1e-2), float(jnp.max(jnp.abs(out2 - ref)))

    print("KERNEL_OK")
</pallas_src>

<mosaic_0001>
module attributes {stable_mosaic.version = 11 : i64} {
  func.func @_mlp_block1_kernel(%arg0: i32, %arg1: memref<128x16xf32, #tpu.memory_space<vmem>>, %arg2: memref<16x128xbf16, #tpu.memory_space<vmem>>, %arg3: memref<1x128xf32, #tpu.memory_space<vmem>>, %arg4: memref<128x128xbf16, #tpu.memory_space<vmem>>, %arg5: memref<1x128xf32, #tpu.memory_space<vmem>>, %arg6: memref<128x128xbf16, #tpu.memory_space<vmem>>, %arg7: memref<1x2x128xf32, #tpu.memory_space<vmem>>) attributes {dimension_semantics = [#tpu.dimension_semantics<parallel>], iteration_bounds = array<i64: 1>, scalar_prefetch = 0 : i64, scratch_operands = 0 : i64, tpu.core_type = #tpu.core_type<tc>, window_params = [{transform_indices = @transform_0, window_bounds = array<i64: 128, 16>}, {pipeline_mode = #tpu.pipeline_mode<synchronous>, transform_indices = @transform_1, window_bounds = array<i64: 16, 128>}, {pipeline_mode = #tpu.pipeline_mode<synchronous>, transform_indices = @transform_2, window_bounds = array<i64: 1, 128>}, {pipeline_mode = #tpu.pipeline_mode<synchronous>, transform_indices = @transform_3, window_bounds = array<i64: 128, 128>}, {pipeline_mode = #tpu.pipeline_mode<synchronous>, transform_indices = @transform_4, window_bounds = array<i64: 1, 128>}, {transform_indices = @transform_5, window_bounds = array<i64: 128, 128>}, {transform_indices = @transform_6, window_bounds = array<i64: 1, 2, 128>}]} {
    %c0 = arith.constant 0 : index
    %c0_0 = arith.constant 0 : index
    %0 = vector.load %arg1[%c0, %c0_0] : memref<128x16xf32, #tpu.memory_space<vmem>>, vector<128x16xf32>
    %1 = arith.truncf %0 : vector<128x16xf32> to vector<128x16xbf16>
    %c0_1 = arith.constant 0 : index
    %c0_2 = arith.constant 0 : index
    %2 = vector.load %arg2[%c0_1, %c0_2] : memref<16x128xbf16, #tpu.memory_space<vmem>>, vector<16x128xbf16>
    %cst = arith.constant dense<0.000000e+00> : vector<128x128xf32>
    %3 = tpu.matmul %1, %2, %cst {dimension_numbers = #tpu.dot_dimension_numbers<[1], [0], [0], [1], [0, 0, 1, 1], [], []>} : vector<128x16xbf16>, vector<16x128xbf16>, vector<128x128xf32> -> vector<128x128xf32>
    %c0_3 = arith.constant 0 : index
    %c0_4 = arith.constant 0 : index
    %4 = vector.load %arg3[%c0_3, %c0_4] : memref<1x128xf32, #tpu.memory_space<vmem>>, vector<1x128xf32>
    %5 = vector.broadcast %4 : vector<1x128xf32> to vector<128x128xf32>
    %6 = arith.addf %3, %5 : vector<128x128xf32>
    %cst_5 = arith.constant 0.000000e+00 : f32
    %7 = vector.broadcast %cst_5 : f32 to vector<128x128xf32>
    %8 = arith.cmpf ogt, %6, %7 : vector<128x128xf32>
    %9 = math.exp %6 : vector<128x128xf32>
    %cst_6 = arith.constant 1.000000e+00 : f32
    %10 = vector.broadcast %cst_6 : f32 to vector<128x128xf32>
    %11 = arith.subf %9, %10 : vector<128x128xf32>
    %12 = arith.select %8, %6, %11 : vector<128x128xi1>, vector<128x128xf32>
    %13 = arith.truncf %12 : vector<128x128xf32> to vector<128x128xbf16>
    %c0_7 = arith.constant 0 : index
    %c0_8 = arith.constant 0 : index
    %14 = vector.load %arg4[%c0_7, %c0_8] : memref<128x128xbf16, #tpu.memory_space<vmem>>, vector<128x128xbf16>
    %cst_9 = arith.constant dense<0.000000e+00> : vector<128x128xf32>
    %15 = tpu.matmul %13, %14, %cst_9 {dimension_numbers = #tpu.dot_dimension_numbers<[1], [0], [0], [1], [0, 0, 1, 1], [], []>} : vector<128x128xbf16>, vector<128x128xbf16>, vector<128x128xf32> -> vector<128x128xf32>
    %c0_10 = arith.constant 0 : index
    %c0_11 = arith.constant 0 : index
    %16 = vector.load %arg5[%c0_10, %c0_11] : memref<1x128xf32, #tpu.memory_space<vmem>>, vector<1x128xf32>
    %17 = vector.broadcast %16 : vector<1x128xf32> to vector<128x128xf32>
    %18 = arith.addf %15, %17 : vector<128x128xf32>
    %cst_12 = arith.constant 0.000000e+00 : f32
    %19 = vector.broadcast %cst_12 : f32 to vector<128x128xf32>
    %20 = arith.cmpf ogt, %18, %19 : vector<128x128xf32>
    %21 = math.exp %18 : vector<128x128xf32>
    %cst_13 = arith.constant 1.000000e+00 : f32
    %22 = vector.broadcast %cst_13 : f32 to vector<128x128xf32>
    %23 = arith.subf %21, %22 : vector<128x128xf32>
    %24 = arith.select %20, %18, %23 : vector<128x128xi1>, vector<128x128xf32>
    %25 = arith.truncf %24 : vector<128x128xf32> to vector<128x128xbf16>
    %c0_14 = arith.constant 0 : index
    %c0_15 = arith.constant 0 : index
    %26 = vector.load %arg6[%c0_14, %c0_15] : memref<128x128xbf16, #tpu.memory_space<vmem>>, vector<128x128xbf16>
    tpu.vector_store %arg6[%c0_14, %c0_15], %25 {strides = array<i32>} : memref<128x128xbf16, #tpu.memory_space<vmem>>, vector<128x128xbf16>,
    %cst_16 = arith.constant dense<0.000000e+00> : vector<128xf32>
    %27 = vector.multi_reduction <add>, %24, %cst_16 [0] : vector<128x128xf32> to vector<128xf32>
    %28 = vector.shape_cast %27 : vector<128xf32> to vector<1x128xf32>
    %29 = arith.mulf %24, %24 : vector<128x128xf32>
    %cst_17 = arith.constant dense<0.000000e+00> : vector<128xf32>
    %30 = vector.multi_reduction <add>, %29, %cst_17 [0] : vector<128x128xf32> to vector<128xf32>
    %31 = vector.shape_cast %30 : vector<128xf32> to vector<1x128xf32>
    %32 = tpu.concatenate %28, %31 in 0 : vector<1x128xf32>, vector<1x128xf32> -> vector<2x128xf32>
    %33 = vector.shape_cast %32 : vector<2x128xf32> to vector<1x2x128xf32>
    %c0_18 = arith.constant 0 : index
    %c0_19 = arith.constant 0 : index
    %c0_20 = arith.constant 0 : index
    %34 = vector.load %arg7[%c0_18, %c0_19, %c0_20] : memref<1x2x128xf32, #tpu.memory_space<vmem>>, vector<1x2x128xf32>
    tpu.vector_store %arg7[%c0_18, %c0_19, %c0_20], %33 {strides = array<i32>} : memref<1x2x128xf32, #tpu.memory_space<vmem>>, vector<1x2x128xf32>,
    return
  }
  func.func @transform_0(%arg0: i32) -> (i32, i32) {
    %c0_i32 = arith.constant 0 : i32
    %c0_i32_0 = arith.constant 0 : i32
    return %arg0, %c0_i32 : i32, i32
  }
  func.func @transform_1(%arg0: i32) -> (i32, i32) {
    %c0_i32 = arith.constant 0 : i32
    %c0_i32_0 = arith.constant 0 : i32
    %c0_i32_1 = arith.constant 0 : i32
    return %c0_i32, %c0_i32_0 : i32, i32
  }
  func.func @transform_2(%arg0: i32) -> (i32, i32) {
    %c0_i32 = arith.constant 0 : i32
    %c0_i32_0 = arith.constant 0 : i32
    %c0_i32_1 = arith.constant 0 : i32
    return %c0_i32, %c0_i32_0 : i32, i32
  }
  func.func @transform_3(%arg0: i32) -> (i32, i32) {
    %c0_i32 = arith.constant 0 : i32
    %c0_i32_0 = arith.constant 0 : i32
    %c0_i32_1 = arith.constant 0 : i32
    return %c0_i32, %c0_i32_0 : i32, i32
  }
  func.func @transform_4(%arg0: i32) -> (i32, i32) {
    %c0_i32 = arith.constant 0 : i32
    %c0_i32_0 = arith.constant 0 : i32
    %c0_i32_1 = arith.constant 0 : i32
    return %c0_i32, %c0_i32_0 : i32, i32
  }
  func.func @transform_5(%arg0: i32) -> (i32, i32) {
    %c0_i32 = arith.constant 0 : i32
    %c0_i32_0 = arith.constant 0 : i32
    return %arg0, %c0_i32 : i32, i32
  }
  func.func @transform_6(%arg0: i32) -> (i32, i32, i32) {
    %c0_i32 = arith.constant 0 : i32
    %c0_i32_0 = arith.constant 0 : i32
    %c0_i32_1 = arith.constant 0 : i32
    return %arg0, %c0_i32, %c0_i32_0 : i32, i32, i32
  }
}

</mosaic_0001>

<llo_original>
// kernel: tpu_custom_call.1
$region0: #{tpu_custom_call.1}
  #allocation0 [shape = 'u32[]', space=smem, size = 0x4, offset = 0x4, fixed_abs, tag = 'smem constant byte address 0x4 - core index']
  #allocation1 [shape = 'u32[144,128]{1,0:T(1,128)}', space=vmem, size = 0x12000, scoped, tag = 'internal scratch']
  %s0 = inlined_call_operand.vmem [shape: f32[128,16], index: 0, kind: input, shape index: {}]
  %s1 = inlined_call_operand.vmem [shape: bf16[16,128], index: 1, kind: input, shape index: {}]
  %s2 = inlined_call_operand.vmem [shape: f32[1,128], index: 2, kind: input, shape index: {}]
  %s3 = inlined_call_operand.vmem [shape: bf16[128,128], index: 3, kind: input, shape index: {}]
  %s4 = inlined_call_operand.vmem [shape: f32[1,128], index: 4, kind: input, shape index: {}]
  %s5 = inlined_call_operand.hbm [shape: bf16[128,128], index: 5, kind: output, shape index: {0}]
  %s6 = inlined_call_operand.hbm [shape: f32[1,2,128], index: 6, kind: output, shape index: {1}]
  %7 = xla_tuple %s5, %s6
  %s8 = sld [smem:[#allocation0]]
  $region38: #{tpu_custom_call.1} parent=0
    _
  %s10 = ssub.s32 1, %s8
  %s11 = scalar_select 0, %s10, %s8
  $region1: #{tpu_custom_call.1} parent=0
    #allocation2 [shape = 'u8[32768]{0}', space=vmem, size = 0x8000, scoped, tag = 'output window, operand 0, single buffered']
    #allocation3 [shape = 's32[1]{0}', space=sflag, size = 0x4, scoped, tag = 'scoped memory for tpu_custom_call.1']
    #allocation4 [shape = 'u8[1024]{0}', space=vmem, size = 0x400, scoped, tag = 'output window, operand 1, single buffered']
    #allocation5 [shape = 's32[1]{0}', space=sflag, size = 0x4, scoped, tag = 'scoped memory for tpu_custom_call.1']
    %12 = vsyncpa [#allocation3], 0
    %13 = vsyncpa [#allocation5], 0
    // Predicated region
    $region2: #{tpu_custom_call.1} parent=1 // pred_check
      _
    $region3: #{tpu_custom_call.1} parent=1 // pred_check_branch
      %15 = sbr.rel (0) target = $region5
    $region4: #{tpu_custom_call.1} parent=1 // pred_region
      _
    $region5: #{tpu_custom_call.1} parent=1 // pred_fallthru
      _
    // Predicated region
    $region6: #{tpu_custom_call.1} parent=1 // pred_check
      _
    $region7: #{tpu_custom_call.1} parent=1 // pred_check_branch
      %17 = sbr.rel (0) target = $region9
    $region8: #{tpu_custom_call.1} parent=1 // pred_region
      _
    $region9: #{tpu_custom_call.1} parent=1 // pred_fallthru
      _
    // Predicated region
    $region10: #{tpu_custom_call.1} parent=1 // pred_check
      _
    $region11: #{tpu_custom_call.1} parent=1 // pred_check_branch
      %19 = sbr.rel (0) target = $region13
    $region12: #{tpu_custom_call.1} parent=1 // pred_region
      _
    $region13: #{tpu_custom_call.1} parent=1 // pred_fallthru
      _
    // Predicated region
    $region14: #{tpu_custom_call.1} parent=1 // pred_check
      _
    $region15: #{tpu_custom_call.1} parent=1 // pred_check_branch
      %21 = sbr.rel (0) target = $region17
    $region16: #{tpu_custom_call.1} parent=1 // pred_region
      _
    $region17: #{tpu_custom_call.1} parent=1 // pred_fallthru
      _
    // Predicated region
    $region18: #{tpu_custom_call.1} parent=1 // pred_check
      _
    $region19: #{tpu_custom_call.1} parent=1 // pred_check_branch
      %23 = sbr.rel (0) target = $region21
    $region20: #{tpu_custom_call.1} parent=1 // pred_region
      _
    $region21: #{tpu_custom_call.1} parent=1 // pred_fallthru
      _
    %v25 = vld [vmem:[%s0] sm:$0xff]
    %v26 = vld [vmem:[%s0 + $0x8] sm:$0xff]
    %v27 = vld [vmem:[%s0 + $0x10] sm:$0xff]
    %v28 = vld [vmem:[%s0 + $0x18] sm:$0xff]
    %v29 = vld [vmem:[%s0 + $0x20] sm:$0xff]
    %v30 = vld [vmem:[%s0 + $0x28] sm:$0xff]
    %v31 = vld [vmem:[%s0 + $0x30] sm:$0xff]
    %v32 = vld [vmem:[%s0 + $0x38] sm:$0xff]
    %v33 = vld [vmem:[%s0 + $0x40] sm:$0xff]
    %v34 = vld [vmem:[%s0 + $0x48] sm:$0xff]
    %v35 = vld [vmem:[%s0 + $0x50] sm:$0xff]
    %v36 = vld [vmem:[%s0 + $0x58] sm:$0xff]
    %v37 = vld [vmem:[%s0 + $0x60] sm:$0xff]
    %v38 = vld [vmem:[%s0 + $0x68] sm:$0xff]
    %v39 = vld [vmem:[%s0 + $0x70] sm:$0xff]
    %v40 = vld [vmem:[%s0 + $0x78] sm:$0xff]
    %v41 = vpack.c.bf16 %v26, %v25
    %v42 = vpack.c.bf16 %v28, %v27
    %v43 = vpack.c.bf16 %v30, %v29
    %v44 = vpack.c.bf16 %v32, %v31
    %v45 = vpack.c.bf16 %v34, %v33
    %v46 = vpack.c.bf16 %v36, %v35
    %v47 = vpack.c.bf16 %v38, %v37
    %v48 = vpack.c.bf16 %v40, %v39
    %v49 = vld [vmem:[%s1] sm:$0xf]
    %v50 = vld [vmem:[%s1 + $0x4] sm:$0xf]
    %v51 = vld [vmem:[%s2] sm:$0x1]
    %v53 = vlaneseq
    %v54 = vshrl.u32 %v53, 7
    %v55 = vsub.s32 0, %v54
    %v56 = vrot.slane %v51, %v55
    %v60 = vunpack.c.l.b16 %v49
    %v61 = vunpack.c.l.b16 %v50
    %v62 = vpack.c.b16 %v61, %v60
    %vm64 = vcmask 130048
    %v66 = vsel %vm64, %v41, 0
    %v69 = vsel %vm64, %v42, 0
    %v72 = vsel %vm64, %v43, 0
    %v75 = vsel %vm64, %v44, 0
    %v78 = vsel %vm64, %v45, 0
    %v81 = vsel %vm64, %v46, 0
    %v84 = vsel %vm64, %v47, 0
    %v87 = vsel %vm64, %v48, 0
    %89 = vmatprep.subr.bf16.mxu0 0
    %90 = vmatpush1.bf16.msra.mxu0 %v62
    %91 = vmatprep.subr.bf16.mxu0 0
    %92 = vmatpush1.bf16.msra.mxu0 0
    %93 = vmatprep.subr.bf16.mxu0 0
    %94 = vmatpush1.bf16.msra.mxu0 0
    %95 = vmatprep.subr.bf16.mxu0 0
    %96 = vmatpush1.bf16.msra.mxu0 0
    %97 = vmatprep.subr.bf16.mxu0 0
    %98 = vmatpush1.bf16.msra.mxu0 0
    %99 = vmatprep.subr.bf16.mxu0 0
    %100 = vmatpush1.bf16.msra.mxu0 0
    %101 = vmatprep.subr.bf16.mxu0 0
    %102 = vmatpush1.bf16.msra.mxu0 0
    %103 = vmatprep.subr.bf16.mxu0 0
    %104 = vmatpush1.bf16.msra.mxu0 0
    %105 = vmatprep.subr.bf16.mxu0 0
    %106 = vmatpush1.bf16.msra.mxu0 0
    %107 = vmatprep.subr.bf16.mxu0 0
    %108 = vmatpush1.bf16.msra.mxu0 0
    %109 = vmatprep.subr.bf16.mxu0 0
    %110 = vmatpush1.bf16.msra.mxu0 0
    %111 = vmatprep.subr.bf16.mxu0 0
    %112 = vmatpush1.bf16.msra.mxu0 0
    %113 = vmatprep.subr.bf16.mxu0 0
    %114 = vmatpush1.bf16.msra.mxu0 0
    %115 = vmatprep.subr.bf16.mxu0 0
    %116 = vmatpush1.bf16.msra.mxu0 0
    %117 = vmatprep.subr.bf16.mxu0 0
    %118 = vmatpush1.bf16.msra.mxu0 0
    %119 = vmatprep.subr.bf16.mxu0 0
    %120 = vmatpush1.bf16.msra.mxu0 0
    %121 = vmatprep.mubr.bf16.mxu0 0
    %122 = vmatmul.mubr.bf16.gmra.mrb[0].mxu0 %v66
    %v123 = vpop.f32.mrb[0].mxu0
    %v124 = vadd.f32 %v56, %v123
    %v125 = vpop.f32.mrb[0].mxu0
    %v126 = vpop.f32.mrb[0].mxu0
    %v127 = vadd.f32 %v56, %v126
    %v128 = vpop.f32.mrb[0].mxu0
    %129 = vmatprep.mubr.bf16.mxu0 0
    %130 = vmatmul.mubr.bf16.gmra.mrb[0].mxu0 %v69
    %v131 = vpop.f32.mrb[0].mxu0
    %v132 = vadd.f32 %v56, %v131
    %v133 = vpop.f32.mrb[0].mxu0
    %v134 = vpop.f32.mrb[0].mxu0
    %v135 = vadd.f32 %v56, %v134
    %v136 = vpop.f32.mrb[0].mxu0
    %137 = vmatprep.mubr.bf16.mxu0 0
    %138 = vmatmul.mubr.bf16.gmra.mrb[0].mxu0 %v72
    %v139 = vpop.f32.mrb[0].mxu0
    %v140 = vadd.f32 %v56, %v139
    %v141 = vpop.f32.mrb[0].mxu0
    %v142 = vpop.f32.mrb[0].mxu0
    %v143 = vadd.f32 %v56, %v142
    %v144 = vpop.f32.mrb[0].mxu0
    %145 = vmatprep.mubr.bf16.mxu0 0
    %146 = vmatmul.mubr.bf16.gmra.mrb[0].mxu0 %v75
    %v147 = vpop.f32.mrb[0].mxu0
    %v148 = vadd.f32 %v56, %v147
    %v149 = vpop.f32.mrb[0].mxu0
    %v150 = vpop.f32.mrb[0].mxu0
    %v151 = vadd.f32 %v56, %v150
    %v152 = vpop.f32.mrb[0].mxu0
    %153 = vmatprep.mubr.bf16.mxu0 0
    %154 = vmatmul.mubr.bf16.gmra.mrb[0].mxu0 %v78
    %v155 = vpop.f32.mrb[0].mxu0
    %v156 = vadd.f32 %v56, %v155
    %v157 = vpop.f32.mrb[0].mxu0
    %v158 = vpop.f32.mrb[0].mxu0
    %v159 = vadd.f32 %v56, %v158
    %v160 = vpop.f32.mrb[0].mxu0
    %161 = vmatprep.mubr.bf16.mxu0 0
    %162 = vmatmul.mubr.bf16.gmra.mrb[0].mxu0 %v81
    %v163 = vpop.f32.mrb[0].mxu0
    %v164 = vadd.f32 %v56, %v163
    %v165 = vpop.f32.mrb[0].mxu0
    %v166 = vpop.f32.mrb[0].mxu0
    %v167 = vadd.f32 %v56, %v166
    %v168 = vpop.f32.mrb[0].mxu0
    %169 = vmatprep.mubr.bf16.mxu0 0
    %170 = vmatmul.mubr.bf16.gmra.mrb[0].mxu0 %v84
    %v171 = vpop.f32.mrb[0].mxu0
    %v172 = vadd.f32 %v56, %v171
    %v173 = vpop.f32.mrb[0].mxu0
    %v174 = vpop.f32.mrb[0].mxu0
    %v175 = vadd.f32 %v56, %v174
    %v176 = vpop.f32.mrb[0].mxu0
    %177 = vmatprep.mubr.bf16.mxu0 0
    %178 = vmatmul.mubr.bf16.gmra.mrb[0].mxu0 %v87
    %v179 = vpop.f32.mrb[0].mxu0
    %v180 = vadd.f32 %v56, %v179
    %v181 = vpop.f32.mrb[0].mxu0
    %v182 = vpop.f32.mrb[0].mxu0
    %v183 = vadd.f32 %v56, %v182
    %v184 = vpop.f32.mrb[0].mxu0
    %185 = vdwg.mxu0
    %vm186 = vcmp.gt.f32.partialorder %v124, 0.0
    %vm187 = vcmp.gt.f32.partialorder %v127, 0.0
    %vm188 = vcmp.gt.f32.partialorder %v132, 0.0
    %vm189 = vcmp.gt.f32.partialorder %v135, 0.0
    %vm190 = vcmp.gt.f32.partialorder %v140, 0.0
    %vm191 = vcmp.gt.f32.partialorder %v143, 0.0
    %vm192 = vcmp.gt.f32.partialorder %v148, 0.0
    %vm193 = vcmp.gt.f32.partialorder %v151, 0.0
    %vm194 = vcmp.gt.f32.partialorder %v156, 0.0
    %vm195 = vcmp.gt.f32.partialorder %v159, 0.0
    %vm196 = vcmp.gt.f32.partialorder %v164, 0.0
    %vm197 = vcmp.gt.f32.partialorder %v167, 0.0
    %vm198 = vcmp.gt.f32.partialorder %v172, 0.0
    %vm199 = vcmp.gt.f32.partialorder %v175, 0.0
    %vm200 = vcmp.gt.f32.partialorder %v180, 0.0
    %vm201 = vcmp.gt.f32.partialorder %v183, 0.0
    %v202 = vmul.f32 %v124, 1.442695
    %v203 = vpow.pop %v202
    %v204 = vmul.f32 %v127, 1.442695
    %v205 = vpow.pop %v204
    %v206 = vmul.f32 %v132, 1.442695
    %v207 = vpow.pop %v206
    %v208 = vmul.f32 %v135, 1.442695
    %v209 = vpow.pop %v208
    %v210 = vmul.f32 %v140, 1.442695
    %v211 = vpow.pop %v210
    %v212 = vmul.f32 %v143, 1.442695
    %v213 = vpow.pop %v212
    %v214 = vmul.f32 %v148, 1.442695
    %v215 = vpow.pop %v214
    %v216 = vmul.f32 %v151, 1.442695
    %v217 = vpow.pop %v216
    %v218 = vmul.f32 %v156, 1.442695
    %v219 = vpow.pop %v218
    %v220 = vmul.f32 %v159, 1.442695
    %v221 = vpow.pop %v220
    %v222 = vmul.f32 %v164, 1.442695
    %v223 = vpow.pop %v222
    %v224 = vmul.f32 %v167, 1.442695
    %v225 = vpow.pop %v224
    %v226 = vmul.f32 %v172, 1.442695
    %v227 = vpow.pop %v226
    %v228 = vmul.f32 %v175, 1.442695
    %v229 = vpow.pop %v228
    %v230 = vmul.f32 %v180, 1.442695
    %v231 = vpow.pop %v230
    %v232 = vmul.f32 %v183, 1.442695
    %v233 = vpow.pop %v232
    %v234 = vsub.f32 %v203, 1.0
    %v235 = vsub.f32 %v205, 1.0
    %v236 = vsub.f32 %v207, 1.0
    %v237 = vsub.f32 %v209, 1.0
    %v238 = vsub.f32 %v211, 1.0
    %v239 = vsub.f32 %v213, 1.0
    %v240 = vsub.f32 %v215, 1.0
    %v241 = vsub.f32 %v217, 1.0
    %v242 = vsub.f32 %v219, 1.0
    %v243 = vsub.f32 %v221, 1.0
    %v244 = vsub.f32 %v223, 1.0
    %v245 = vsub.f32 %v225, 1.0
    %v246 = vsub.f32 %v227, 1.0
    %v247 = vsub.f32 %v229, 1.0
    %v248 = vsub.f32 %v231, 1.0
    %v249 = vsub.f32 %v233, 1.0
    %v250 = vsel %vm186, %v124, %v234
    %v251 = vsel %vm187, %v127, %v235
    %v252 = vsel %vm188, %v132, %v236
    %v253 = vsel %vm189, %v135, %v237
    %v254 = vsel %vm190, %v140, %v238
    %v255 = vsel %vm191, %v143, %v239
    %v256 = vsel %vm192, %v148, %v240
    %v257 = vsel %vm193, %v151, %v241
    %v258 = vsel %vm194, %v156, %v242
    %v259 = vsel %vm195, %v159, %v243
    %v260 = vsel %vm196, %v164, %v244
    %v261 = vsel %vm197, %v167, %v245
    %v262 = vsel %vm198, %v172, %v246
    %v263 = vsel %vm199, %v175, %v247
    %v264 = vsel %vm200, %v180, %v248
    %v265 = vsel %vm201, %v183, %v249
    %v266 = vpack.c.bf16 %v251, %v250
    %v267 = vpack.c.bf16 %v253, %v252
    %v268 = vpack.c.bf16 %v255, %v254
    %v269 = vpack.c.bf16 %v257, %v256
    %v270 = vpack.c.bf16 %v259, %v258
    %v271 = vpack.c.bf16 %v261, %v260
    %v272 = vpack.c.bf16 %v263, %v262
    %v273 = vpack.c.bf16 %v265, %v264
    %v274 = vld [vmem:[%s3] sm:$0xf]
    %v275 = vld [vmem:[%s3 + $0x4] sm:$0xf]
    %v276 = vld [vmem:[%s3 + $0x8] sm:$0xf]
    %v277 = vld [vmem:[%s3 + $0xc] sm:$0xf]
    %v278 = vld [vmem:[%s3 + $0x10] sm:$0xf]
    %v279 = vld [vmem:[%s3 + $0x14] sm:$0xf]
    %v280 = vld [vmem:[%s3 + $0x18] sm:$0xf]
    %v281 = vld [vmem:[%s3 + $0x1c] sm:$0xf]
    %v282 = vld [vmem:[%s3 + $0x20] sm:$0xf]
    %v283 = vld [vmem:[%s3 + $0x24] sm:$0xf]
    %v284 = vld [vmem:[%s3 + $0x28] sm:$0xf]
    %v285 = vld [vmem:[%s3 + $0x2c] sm:$0xf]
    %v286 = vld [vmem:[%s3 + $0x30] sm:$0xf]
    %v287 = vld [vmem:[%s3 + $0x34] sm:$0xf]
    %v288 = vld [vmem:[%s3 + $0x38] sm:$0xf]
    %v289 = vld [vmem:[%s3 + $0x3c] sm:$0xf]
    %v290 = vld [vmem:[%s4] sm:$0x1]
    %v292 = vlaneseq
    %v293 = vshrl.u32 %v292, 7
    %v294 = vsub.s32 0, %v293
    %v295 = vrot.slane %v290, %v294
    %v313 = vunpack.c.l.b16 %v274
    %v314 = vunpack.c.l.b16 %v275
    %v315 = vunpack.c.l.b16 %v276
    %v316 = vunpack.c.l.b16 %v277
    %v317 = vunpack.c.l.b16 %v278
    %v318 = vunpack.c.l.b16 %v279
    %v319 = vunpack.c.l.b16 %v280
    %v320 = vunpack.c.l.b16 %v281
    %v321 = vunpack.c.l.b16 %v282
    %v322 = vunpack.c.l.b16 %v283
    %v323 = vunpack.c.l.b16 %v284
    %v324 = vunpack.c.l.b16 %v285
    %v325 = vunpack.c.l.b16 %v286
    %v326 = vunpack.c.l.b16 %v287
    %v327 = vunpack.c.l.b16 %v288
    %v328 = vunpack.c.l.b16 %v289
    %v329 = vpack.c.b16 %v314, %v313
    %v330 = vpack.c.b16 %v316, %v315
    %v331 = vpack.c.b16 %v318, %v317
    %v332 = vpack.c.b16 %v320, %v319
    %v333 = vpack.c.b16 %v322, %v321
    %v334 = vpack.c.b16 %v324, %v323
    %v335 = vpack.c.b16 %v326, %v325
    %v336 = vpack.c.b16 %v328, %v327
    %345 = vmatprep.subr.bf16.mxu0 0
    %346 = vmatpush1.bf16.msra.mxu0 %v329
    %347 = vmatprep.subr.bf16.mxu0 0
    %348 = vmatpush1.bf16.msra.mxu0 %v330
    %349 = vmatprep.subr.bf16.mxu0 0
    %350 = vmatpush1.bf16.msra.mxu0 %v331
    %351 = vmatprep.subr.bf16.mxu0 0
    %352 = vmatpush1.bf16.msra.mxu0 %v332
    %353 = vmatprep.subr.bf16.mxu0 0
    %354 = vmatpush1.bf16.msra.mxu0 %v333
    %355 = vmatprep.subr.bf16.mxu0 0
    %356 = vmatpush1.bf16.msra.mxu0 %v334
    %357 = vmatprep.subr.bf16.mxu0 0
    %358 = vmatpush1.bf16.msra.mxu0 %v335
    %359 = vmatprep.subr.bf16.mxu0 0
    %360 = vmatpush1.bf16.msra.mxu0 %v336
    %361 = vmatprep.subr.bf16.mxu0 0
    %362 = vmatpush1.bf16.msra.mxu0 0
    %363 = vmatprep.subr.bf16.mxu0 0
    %364 = vmatpush1.bf16.msra.mxu0 0
    %365 = vmatprep.subr.bf16.mxu0 0
    %366 = vmatpush1.bf16.msra.mxu0 0
    %367 = vmatprep.subr.bf16.mxu0 0
    %368 = vmatpush1.bf16.msra.mxu0 0
    %369 = vmatprep.subr.bf16.mxu0 0
    %370 = vmatpush1.bf16.msra.mxu0 0
    %371 = vmatprep.subr.bf16.mxu0 0
    %372 = vmatpush1.bf16.msra.mxu0 0
    %373 = vmatprep.subr.bf16.mxu0 0
    %374 = vmatpush1.bf16.msra.mxu0 0
    %375 = vmatprep.subr.bf16.mxu0 0
    %376 = vmatpush1.bf16.msra.mxu0 0
    %377 = vmatprep.mubr.bf16.mxu0 0
    %378 = vmatmul.mubr.bf16.gmra.mrb[0].mxu0 %v266
    %v379 = vpop.f32.mrb[0].mxu0
    %v380 = vadd.f32 %v295, %v379
    %v381 = vpop.f32.mrb[0].mxu0
    %v382 = vpop.f32.mrb[0].mxu0
    %v383 = vadd.f32 %v295, %v382
    %v384 = vpop.f32.mrb[0].mxu0
    %385 = vmatprep.mubr.bf16.mxu0 0
    %386 = vmatmul.mubr.bf16.gmra.mrb[0].mxu0 %v267
    %v387 = vpop.f32.mrb[0].mxu0
    %v388 = vadd.f32 %v295, %v387
    %v389 = vpop.f32.mrb[0].mxu0
    %v390 = vpop.f32.mrb[0].mxu0
    %v391 = vadd.f32 %v295, %v390
    %v392 = vpop.f32.mrb[0].mxu0
    %393 = vmatprep.mubr.bf16.mxu0 0
    %394 = vmatmul.mubr.bf16.gmra.mrb[0].mxu0 %v268
    %v395 = vpop.f32.mrb[0].mxu0
    %v396 = vadd.f32 %v295, %v395
    %v397 = vpop.f32.mrb[0].mxu0
    %v398 = vpop.f32.mrb[0].mxu0
    %v399 = vadd.f32 %v295, %v398
    %v400 = vpop.f32.mrb[0].mxu0
    %401 = vmatprep.mubr.bf16.mxu0 0
    %402 = vmatmul.mubr.bf16.gmra.mrb[0].mxu0 %v269
    %v403 = vpop.f32.mrb[0].mxu0
    %v404 = vadd.f32 %v295, %v403
    %v405 = vpop.f32.mrb[0].mxu0
    %v406 = vpop.f32.mrb[0].mxu0
    %v407 = vadd.f32 %v295, %v406
    %v408 = vpop.f32.mrb[0].mxu0
    %409 = vmatprep.mubr.bf16.mxu0 0
    %410 = vmatmul.mubr.bf16.gmra.mrb[0].mxu0 %v270
    %v411 = vpop.f32.mrb[0].mxu0
    %v412 = vadd.f32 %v295, %v411
    %v413 = vpop.f32.mrb[0].mxu0
    %v414 = vpop.f32.mrb[0].mxu0
    %v415 = vadd.f32 %v295, %v414
    %v416 = vpop.f32.mrb[0].mxu0
    %417 = vmatprep.mubr.bf16.mxu0 0
    %418 = vmatmul.mubr.bf16.gmra.mrb[0].mxu0 %v271
    %v419 = vpop.f32.mrb[0].mxu0
    %v420 = vadd.f32 %v295, %v419
    %v421 = vpop.f32.mrb[0].mxu0
    %v422 = vpop.f32.mrb[0].mxu0
    %v423 = vadd.f32 %v295, %v422
    %v424 = vpop.f32.mrb[0].mxu0
    %425 = vmatprep.mubr.bf16.mxu0 0
    %426 = vmatmul.mubr.bf16.gmra.mrb[0].mxu0 %v272
    %v427 = vpop.f32.mrb[0].mxu0
    %v428 = vadd.f32 %v295, %v427
    %v429 = vpop.f32.mrb[0].mxu0
    %v430 = vpop.f32.mrb[0].mxu0
    %v431 = vadd.f32 %v295, %v430
    %v432 = vpop.f32.mrb[0].mxu0
    %433 = vmatprep.mubr.bf16.mxu0 0
    %434 = vmatmul.mubr.bf16.gmra.mrb[0].mxu0 %v273
    %v435 = vpop.f32.mrb[0].mxu0
    %v436 = vadd.f32 %v295, %v435
    %v437 = vpop.f32.mrb[0].mxu0
    %v438 = vpop.f32.mrb[0].mxu0
    %v439 = vadd.f32 %v295, %v438
    %v440 = vpop.f32.mrb[0].mxu0
    %441 = vdwg.mxu0
    %vm442 = vcmp.gt.f32.partialorder %v380, 0.0
    %vm443 = vcmp.gt.f32.partialorder %v383, 0.0
    %vm444 = vcmp.gt.f32.partialorder %v388, 0.0
    %vm445 = vcmp.gt.f32.partialorder %v391, 0.0
    %vm446 = vcmp.gt.f32.partialorder %v396, 0.0
    %vm447 = vcmp.gt.f32.partialorder %v399, 0.0
    %vm448 = vcmp.gt.f32.partialorder %v404, 0.0
    %vm449 = vcmp.gt.f32.partialorder %v407, 0.0
    %vm450 = vcmp.gt.f32.partialorder %v412, 0.0
    %vm451 = vcmp.gt.f32.partialorder %v415, 0.0
    %vm452 = vcmp.gt.f32.partialorder %v420, 0.0
    %vm453 = vcmp.gt.f32.partialorder %v423, 0.0
    %vm454 = vcmp.gt.f32.partialorder %v428, 0.0
    %vm455 = vcmp.gt.f32.partialorder %v431, 0.0
    %vm456 = vcmp.gt.f32.partialorder %v436, 0.0
    %vm457 = vcmp.gt.f32.partialorder %v439, 0.0
    %v458 = vmul.f32 %v380, 1.442695
    %v459 = vpow.pop %v458
    %v460 = vmul.f32 %v383, 1.442695
    %v461 = vpow.pop %v460
    %v462 = vmul.f32 %v388, 1.442695
    %v463 = vpow.pop %v462
    %v464 = vmul.f32 %v391, 1.442695
    %v465 = vpow.pop %v464
    %v466 = vmul.f32 %v396, 1.442695
    %v467 = vpow.pop %v466
    %v468 = vmul.f32 %v399, 1.442695
    %v469 = vpow.pop %v468
    %v470 = vmul.f32 %v404, 1.442695
    %v471 = vpow.pop %v470
    %v472 = vmul.f32 %v407, 1.442695
    %v473 = vpow.pop %v472
    %v474 = vmul.f32 %v412, 1.442695
    %v475 = vpow.pop %v474
    %v476 = vmul.f32 %v415, 1.442695
    %v477 = vpow.pop %v476
    %v478 = vmul.f32 %v420, 1.442695
    %v479 = vpow.pop %v478
    %v480 = vmul.f32 %v423, 1.442695
    %v481 = vpow.pop %v480
    %v482 = vmul.f32 %v428, 1.442695
    %v483 = vpow.pop %v482
    %v484 = vmul.f32 %v431, 1.442695
    %v485 = vpow.pop %v484
    %v486 = vmul.f32 %v436, 1.442695
    %v487 = vpow.pop %v486
    %v488 = vmul.f32 %v439, 1.442695
    %v489 = vpow.pop %v488
    %v490 = vsub.f32 %v459, 1.0
    %v491 = vsub.f32 %v461, 1.0
    %v492 = vsub.f32 %v463, 1.0
    %v493 = vsub.f32 %v465, 1.0
    %v494 = vsub.f32 %v467, 1.0
    %v495 = vsub.f32 %v469, 1.0
    %v496 = vsub.f32 %v471, 1.0
    %v497 = vsub.f32 %v473, 1.0
    %v498 = vsub.f32 %v475, 1.0
    %v499 = vsub.f32 %v477, 1.0
    %v500 = vsub.f32 %v479, 1.0
    %v501 = vsub.f32 %v481, 1.0
    %v502 = vsub.f32 %v483, 1.0
    %v503 = vsub.f32 %v485, 1.0
    %v504 = vsub.f32 %v487, 1.0
    %v505 = vsub.f32 %v489, 1.0
    %v506 = vsel %vm442, %v380, %v490
    %v507 = vsel %vm443, %v383, %v491
    %v508 = vsel %vm444, %v388, %v492
    %v509 = vsel %vm445, %v391, %v493
    %v510 = vsel %vm446, %v396, %v494
    %v511 = vsel %vm447, %v399, %v495
    %v512 = vsel %vm448, %v404, %v496
    %v513 = vsel %vm449, %v407, %v497
    %v514 = vsel %vm450, %v412, %v498
    %v515 = vsel %vm451, %v415, %v499
    %v516 = vsel %vm452, %v420, %v500
    %v517 = vsel %vm453, %v423, %v501
    %v518 = vsel %vm454, %v428, %v502
    %v519 = vsel %vm455, %v431, %v503
    %v520 = vsel %vm456, %v436, %v504
    %v521 = vsel %vm457, %v439, %v505
    %v522 = vpack.c.bf16 %v507, %v506
    %v523 = vpack.c.bf16 %v509, %v508
    %v524 = vpack.c.bf16 %v511, %v510
    %v525 = vpack.c.bf16 %v513, %v512
    %v526 = vpack.c.bf16 %v515, %v514
    %v527 = vpack.c.bf16 %v517, %v516
    %v528 = vpack.c.bf16 %v519, %v518
    %v529 = vpack.c.bf16 %v521, %v520
    %v538 = vunpack.c.l.b16 %v522
    %v539 = vunpack.c.h.b16 %v522
    %v540 = vunpack.c.l.b16 %v523
    %v541 = vunpack.c.h.b16 %v523
    %v542 = vunpack.c.l.b16 %v524
    %v543 = vunpack.c.h.b16 %v524
    %v544 = vunpack.c.l.b16 %v525
    %v545 = vunpack.c.h.b16 %v525
    %v546 = vunpack.c.l.b16 %v526
    %v547 = vunpack.c.h.b16 %v526
    %v548 = vunpack.c.l.b16 %v527
    %v549 = vunpack.c.h.b16 %v527
    %v550 = vunpack.c.l.b16 %v528
    %v551 = vunpack.c.h.b16 %v528
    %v552 = vunpack.c.l.b16 %v529
    %v553 = vunpack.c.h.b16 %v529
    %v554 = vpack.c.b16 %v538, %v538
    %v555 = vpack.c.b16 %v539, %v539
    %v556 = vpack.c.b16 %v540, %v540
    %v557 = vpack.c.b16 %v541, %v541
    %v558 = vpack.c.b16 %v542, %v542
    %v559 = vpack.c.b16 %v543, %v543
    %v560 = vpack.c.b16 %v544, %v544
    %v561 = vpack.c.b16 %v545, %v545
    %v562 = vpack.c.b16 %v546, %v546
    %v563 = vpack.c.b16 %v547, %v547
    %v564 = vpack.c.b16 %v548, %v548
    %v565 = vpack.c.b16 %v549, %v549
    %v566 = vpack.c.b16 %v550, %v550
    %v567 = vpack.c.b16 %v551, %v551
    %v568 = vpack.c.b16 %v552, %v552
    %v569 = vpack.c.b16 %v553, %v553
    %586 = vst [vmem:[#allocation2] sm:$0xf] %v554
    %587 = vst [vmem:[#allocation2 + $0x4] sm:$0xf] %v555
    %588 = vst [vmem:[#allocation2 + $0x8] sm:$0xf] %v556
    %589 = vst [vmem:[#allocation2 + $0xc] sm:$0xf] %v557
    %590 = vst [vmem:[#allocation2 + $0x10] sm:$0xf] %v558
    %591 = vst [vmem:[#allocation2 + $0x14] sm:$0xf] %v559
    %592 = vst [vmem:[#allocation2 + $0x18] sm:$0xf] %v560
    %593 = vst [vmem:[#allocation2 + $0x1c] sm:$0xf] %v561
    %594 = vst [vmem:[#allocation2 + $0x20] sm:$0xf] %v562
    %595 = vst [vmem:[#allocation2 + $0x24] sm:$0xf] %v563
    %596 = vst [vmem:[#allocation2 + $0x28] sm:$0xf] %v564
    %597 = vst [vmem:[#allocation2 + $0x2c] sm:$0xf] %v565
    %598 = vst [vmem:[#allocation2 + $0x30] sm:$0xf] %v566
    %599 = vst [vmem:[#allocation2 + $0x34] sm:$0xf] %v567
    %600 = vst [vmem:[#allocation2 + $0x38] sm:$0xf] %v568
    %601 = vst [vmem:[#allocation2 + $0x3c] sm:$0xf] %v569
    %v602 = vadd.f32 %v506, %v507
    %v603 = vadd.f32 %v602, %v508
    %v604 = vadd.f32 %v603, %v509
    %v605 = vadd.f32 %v604, %v510
    %v606 = vadd.f32 %v605, %v511
    %v607 = vadd.f32 %v606, %v512
    %v608 = vadd.f32 %v607, %v513
    %v609 = vadd.f32 %v608, %v514
    %v610 = vadd.f32 %v609, %v515
    %v611 = vadd.f32 %v610, %v516
    %v612 = vadd.f32 %v611, %v517
    %v613 = vadd.f32 %v612, %v518
    %v614 = vadd.f32 %v613, %v519
    %v615 = vadd.f32 %v614, %v520
    %v616 = vadd.f32 %v615, %v521
    %v617 = vrot.slane %v616, 4
    %v618 = vadd.f32 %v616, %v617
    %v619 = vrot.slane %v618, 2
    %v620 = vadd.f32 %v618, %v619
    %v621 = vrot.slane %v620, 1
    %v622 = vadd.f32 %v620, %v621
    %v623 = vmul.f32 %v506, %v506
    %v624 = vmul.f32 %v507, %v507
    %v625 = vmul.f32 %v508, %v508
    %v626 = vmul.f32 %v509, %v509
    %v627 = vmul.f32 %v510, %v510
    %v628 = vmul.f32 %v511, %v511
    %v629 = vmul.f32 %v512, %v512
    %v630 = vmul.f32 %v513, %v513
    %v631 = vmul.f32 %v514, %v514
    %v632 = vmul.f32 %v515, %v515
    %v633 = vmul.f32 %v516, %v516
    %v634 = vmul.f32 %v517, %v517
    %v635 = vmul.f32 %v518, %v518
    %v636 = vmul.f32 %v519, %v519
    %v637 = vmul.f32 %v520, %v520
    %v638 = vmul.f32 %v521, %v521
    %v639 = vadd.f32 %v623, %v624
    %v640 = vadd.f32 %v639, %v625
    %v641 = vadd.f32 %v640, %v626
    %v642 = vadd.f32 %v641, %v627
    %v643 = vadd.f32 %v642, %v628
    %v644 = vadd.f32 %v643, %v629
    %v645 = vadd.f32 %v644, %v630
    %v646 = vadd.f32 %v645, %v631
    %v647 = vadd.f32 %v646, %v632
    %v648 = vadd.f32 %v647, %v633
    %v649 = vadd.f32 %v648, %v634
    %v650 = vadd.f32 %v649, %v635
    %v651 = vadd.f32 %v650, %v636
    %v652 = vadd.f32 %v651, %v637
    %v653 = vadd.f32 %v652, %v638
    %v654 = vrot.slane %v653, 4
    %v655 = vadd.f32 %v653, %v654
    %v656 = vrot.slane %v655, 2
    %v657 = vadd.f32 %v655, %v656
    %v658 = vrot.slane %v657, 1
    %v659 = vadd.f32 %v657, %v658
    %vm660 = vcmask 1040384
    %v661 = vsel %vm660, %v622, %v659
    %662 = vst [vmem:[#allocation4] sm:$0x3] %v661
    // Predicated region
    $region22: #{tpu_custom_call.1} parent=1 // pred_check
      _
    $region23: #{tpu_custom_call.1} parent=1 // pred_check_branch
      %664 = sbr.rel (0) target = $region25
    $region24: #{tpu_custom_call.1} parent=1 // pred_region
      %s666 = ssub.s32 1024, 1024
      %667 = vsyncadd [#allocation3], %s666
      %s668 = sshll.u32 [#allocation2], 4
      %s669 = int_to_ptr.vmem [resolvable:$true] %s668
      %674 = dma.vmem_to_hbm [thread:$0]  %s669, 1024, %s5, [#allocation3], 64, 64, 4
    $region25: #{tpu_custom_call.1} parent=1 // pred_fallthru
      _
    // Predicated region
    $region26: #{tpu_custom_call.1} parent=1 // pred_check
      _
    $region27: #{tpu_custom_call.1} parent=1 // pred_check_branch
      %676 = sbr.rel (0) target = $region29
    $region28: #{tpu_custom_call.1} parent=1 // pred_region
      %s678 = ssub.s32 32, 32
      %679 = vsyncadd [#allocation5], %s678
      %s681 = sshll.u32 [#allocation4], 4
      %s682 = int_to_ptr.vmem [resolvable:$true] %s681
      %684 = dma.vmem_to_hbm [thread:$0]  %s682, 32, %s6, [#allocation5]
    $region29: #{tpu_custom_call.1} parent=1 // pred_fallthru
      _
    // Predicated region
    $region30: #{tpu_custom_call.1} parent=1 // pred_check
      _
    $region31: #{tpu_custom_call.1} parent=1 // pred_check_branch
      %686 = sbr.rel (0) target = $region33
    $region32: #{tpu_custom_call.1} parent=1 // pred_region
      %687 = dma.done [#allocation3], 1024
    $region33: #{tpu_custom_call.1} parent=1 // pred_fallthru
      _
    // Predicated region
    $region34: #{tpu_custom_call.1} parent=1 // pred_check
      _
    $region35: #{tpu_custom_call.1} parent=1 // pred_check_branch
      %689 = sbr.rel (0) target = $region37
    $region36: #{tpu_custom_call.1} parent=1 // pred_region
      %690 = dma.done [#allocation5], 32
    $region37: #{tpu_custom_call.1} parent=1 // pred_fallthru
      _
    %691 = vsyncpa [#allocation3], 1
    %692 = vsyncpa [#allocation5], 1

</llo_original>
